<compile_context>
chip_gen: v7x
topology: tpu7x:2x2x1
jax: 0.10.0
libtpu: 0.0.40
codegen_flags: <defaults>
</compile_context>

<pallas_src>
import functools
import math

import jax
import jax.numpy as jnp
from jax.experimental import pallas as pl
from jax.experimental.pallas import tpu as pltpu

LANE = 128            # lane padding unit (v5e MXU-native; see note below for 256)
BF16_SUBLANE = 16     # bf16 packs 16 rows per sublane group
TILE_M_DEFAULT = 256  # batch rows per grid step


def _round_up(x, m):
    return ((x + m - 1) // m) * m


# ----------------------------------------------------------------------------
# Fused kernel: x -> L0 -> (L1, ReLU) -> ... -> (L_{n-2}, ReLU) -> L_{n-1}
# refs = (x_ref, w0_ref, b0_ref, w1_ref, b1_ref, ..., o_ref)
# ----------------------------------------------------------------------------
def _fused_mlp_kernel(*refs, n_layers: int):
    x_ref = refs[0]
    o_ref = refs[-1]
    h = x_ref[...]  # bf16 activation feed for the MXU
    for i in range(n_layers):
        w_ref = refs[1 + 2 * i]
        b_ref = refs[2 + 2 * i]
        # bf16 x bf16 -> f32 accumulation on the MXU.
        acc = jnp.dot(h, w_ref[...], preferred_element_type=jnp.float32)
        acc = acc + b_ref[...]  # bias add on the f32 accumulator (VPU)
        # ReLU after every Linear except the first and the last — matches the
        # PyTorch Sequential construction in the module.
        if 1 <= i < n_layers - 1:
            acc = jnp.maximum(acc, 0.0)
        # Feed the next MXU pass in bf16; keep the final layer's output in f32.
        h = acc.astype(jnp.bfloat16) if i < n_layers - 1 else acc
    o_ref[...] = h.astype(o_ref.dtype)


# ----------------------------------------------------------------------------
# Parameter init (torch.nn.Linear default: U(-1/sqrt(fan_in), +1/sqrt(fan_in)))
# stored in torch layout (out, in), f32 — used by the plain-JAX reference.
# ----------------------------------------------------------------------------
def init_mlp_params(key, input_size, layer_sizes, output_dim):
    dims = [input_size] + list(layer_sizes) + [output_dim]
    params = []
    for i in range(len(dims) - 1):
        fan_in, fan_out = dims[i], dims[i + 1]
        key, kw, kb = jax.random.split(key, 3)
        bound = 1.0 / math.sqrt(fan_in)
        w = jax.random.uniform(kw, (fan_out, fan_in), jnp.float32, -bound, bound)
        b = jax.random.uniform(kb, (fan_out,), jnp.float32, -bound, bound)
        params.append((w, b))
    return params


def prepare_kernel_params(params, input_size):
    """One-time (init-time) transpose + lane pad + bf16 cast.

    Layer 0 keeps the TRUE input_size as its K dim (so x needs no K padding /
    no extra HBM copy in the hot path). Later layers' K is padded to the
    previous layer's padded output width with zero-filled rows, so the lane
    padding is semantically transparent end-to-end.
    NOTE: on v6e/v7x (2x256x256 MXU) genuinely wide layers benefit from 256-
    aligned padding; 128 is kept here since it is optimal on v5e and lossless
    for the small hidden widths used below.
    """
    prepped = []
    k_dim = input_size
    for w, b in params:
        fan_out, fan_in = w.shape
        n_pad = _round_up(fan_out, LANE)
        w_t = (jnp.zeros((k_dim, n_pad), jnp.float32)
               .at[:fan_in, :fan_out].set(w.T)
               .astype(jnp.bfloat16))                       # bf16 weights
        b_p = jnp.zeros((1, n_pad), jnp.float32).at[0, :fan_out].set(b)  # f32 bias
        prepped.append((w_t, b_p))
        k_dim = n_pad
    return prepped


# ----------------------------------------------------------------------------
# Fused forward (single pallas_call, batch-tiled grid, weights VMEM-resident).
# ----------------------------------------------------------------------------
def mlp_forward(x, kernel_params, input_size, output_dim, tile_m=TILE_M_DEFAULT):
    x2 = x.reshape(-1, input_size).astype(jnp.bfloat16)
    m = x2.shape[0]

    # Batch tile: full-M single block for small batches (block dim == full
    # array dim is always layout-legal), 256-row tiles (multiple of the bf16
    # sublane pack of 16) with a partial last block otherwise.
    if m <= tile_m:
        tile_m = m
    else:
        tile_m = _round_up(tile_m, BF16_SUBLANE)
    grid = (pl.cdiv(m, tile_m),)

    n_layers = len(kernel_params)
    n_out_pad = kernel_params[-1][0].shape[1]

    flat_args = [x2]
    # x tile revolves per grid step.  If its DMA ever shows up as exposed at
    # large batch, add pipeline_mode=pl.Buffered(3) here (skip on v7x if VMEM-tight).
    in_specs = [pl.BlockSpec((tile_m, input_size), lambda i: (i, 0))]
    for w, b in kernel_params:
        flat_args.append(w)
        flat_args.append(b)
        # Same block for every grid step -> weights/biases stay VMEM-resident.
        in_specs.append(pl.BlockSpec(w.shape, lambda i: (0, 0)))
        in_specs.append(pl.BlockSpec(b.shape, lambda i: (0, 0)))

    kernel = functools.partial(_fused_mlp_kernel, n_layers=n_layers)
    out = pl.pallas_call(
        kernel,
        out_shape=jax.ShapeDtypeStruct((m, n_out_pad), jnp.float32),
        grid=grid,
        in_specs=in_specs,
        out_specs=pl.BlockSpec((tile_m, n_out_pad), lambda i: (i, 0)),
        compiler_params=pltpu.CompilerParams(
            # Batch axis is independent per tile -> shard across TCs on v7x.
            dimension_semantics=("parallel",),
            # Raise the scoped-VMEM cap (default 16/32 MiB) while staying
            # within v7x's 64 MiB physical VMEM.
            vmem_limit_bytes=64 * 1024 * 1024,
        ),
    )(*flat_args)

    return out[:, :output_dim]


# ----------------------------------------------------------------------------
# Plain-JAX f32 reference (torch-layout params), matching the module exactly.
# ----------------------------------------------------------------------------
def mlp_reference(x, params, input_size):
    x = x.reshape(-1, input_size).astype(jnp.float32)
    n_layers = len(params)
    for i, (w, b) in enumerate(params):
        x = x @ w.T + b
        if 1 <= i < n_layers - 1:
            x = jnp.maximum(x, 0.0)
    return x


if __name__ == "__main__":
    key = jax.random.PRNGKey(0)

    # Small shapes consistent with the module (MNIST-like flattening).
    batch = 4
    input_size = 64            # e.g. an 8x8 "image"
    layer_sizes = [32, 32]
    output_dim = 16

    k_x, k_p = jax.random.split(key)
    x = jax.random.normal(k_x, (batch, 8, 8), jnp.float32)  # reshaped to (4, 64)
    params = init_mlp_params(k_p, input_size, layer_sizes, output_dim)

    # One-time parameter preparation (transpose + lane pad + bf16) -- NOT in
    # the per-call hot path.
    kernel_params = prepare_kernel_params(params, input_size)

    fwd = jax.jit(functools.partial(mlp_forward,
                                    input_size=input_size,
                                    output_dim=output_dim))
    out = jax.block_until_ready(fwd(x, kernel_params))

    ref = mlp_reference(x, params, input_size)
    assert out.shape == (batch, output_dim), out.shape
    # bf16 operands (f32 accumulation) vs the f32 reference -> loosened tol.
    max_err = float(jnp.max(jnp.abs(out - ref)))
    assert jnp.allclose(out, ref, atol=3e-2, rtol=3e-2), f"mismatch, max_err={max_err}"

    print("KERNEL_OK")
</pallas_src>

<mosaic_0001>
module attributes {stable_mosaic.version = 11 : i64} {
  func.func @_fused_mlp_kernel(%arg0: i32, %arg1: memref<4x64xbf16, #tpu.memory_space<vmem>>, %arg2: memref<64x128xbf16, #tpu.memory_space<vmem>>, %arg3: memref<1x128xf32, #tpu.memory_space<vmem>>, %arg4: memref<128x128xbf16, #tpu.memory_space<vmem>>, %arg5: memref<1x128xf32, #tpu.memory_space<vmem>>, %arg6: memref<128x128xbf16, #tpu.memory_space<vmem>>, %arg7: memref<1x128xf32, #tpu.memory_space<vmem>>, %arg8: memref<4x128xf32, #tpu.memory_space<vmem>>) attributes {dimension_semantics = [#tpu.dimension_semantics<parallel>], iteration_bounds = array<i64: 1>, scalar_prefetch = 0 : i64, scratch_operands = 0 : i64, tpu.core_type = #tpu.core_type<tc>, window_params = [{transform_indices = @transform_0, window_bounds = array<i64: 4, 64>}, {pipeline_mode = #tpu.pipeline_mode<synchronous>, transform_indices = @transform_1, window_bounds = array<i64: 64, 128>}, {pipeline_mode = #tpu.pipeline_mode<synchronous>, transform_indices = @transform_2, window_bounds = array<i64: 1, 128>}, {pipeline_mode = #tpu.pipeline_mode<synchronous>, transform_indices = @transform_3, window_bounds = array<i64: 128, 128>}, {pipeline_mode = #tpu.pipeline_mode<synchronous>, transform_indices = @transform_4, window_bounds = array<i64: 1, 128>}, {pipeline_mode = #tpu.pipeline_mode<synchronous>, transform_indices = @transform_5, window_bounds = array<i64: 128, 128>}, {pipeline_mode = #tpu.pipeline_mode<synchronous>, transform_indices = @transform_6, window_bounds = array<i64: 1, 128>}, {transform_indices = @transform_7, window_bounds = array<i64: 4, 128>}]} {
    %c0 = arith.constant 0 : index
    %c0_0 = arith.constant 0 : index
    %0 = vector.load %arg1[%c0, %c0_0] : memref<4x64xbf16, #tpu.memory_space<vmem>>, vector<4x64xbf16>
    %c0_1 = arith.constant 0 : index
    %c0_2 = arith.constant 0 : index
    %1 = vector.load %arg2[%c0_1, %c0_2] : memref<64x128xbf16, #tpu.memory_space<vmem>>, vector<64x128xbf16>
    %cst = arith.constant dense<0.000000e+00> : vector<4x128xf32>
    %2 = tpu.matmul %0, %1, %cst {dimension_numbers = #tpu.dot_dimension_numbers<[1], [0], [0], [1], [0, 0, 1, 1], [], []>} : vector<4x64xbf16>, vector<64x128xbf16>, vector<4x128xf32> -> vector<4x128xf32>
    %c0_3 = arith.constant 0 : index
    %c0_4 = arith.constant 0 : index
    %3 = vector.load %arg3[%c0_3, %c0_4] : memref<1x128xf32, #tpu.memory_space<vmem>>, vector<1x128xf32>
    %4 = vector.broadcast %3 : vector<1x128xf32> to vector<4x128xf32>
    %5 = arith.addf %2, %4 : vector<4x128xf32>
    %6 = arith.truncf %5 : vector<4x128xf32> to vector<4x128xbf16>
    %c0_5 = arith.constant 0 : index
    %c0_6 = arith.constant 0 : index
    %7 = vector.load %arg4[%c0_5, %c0_6] : memref<128x128xbf16, #tpu.memory_space<vmem>>, vector<128x128xbf16>
    %cst_7 = arith.constant dense<0.000000e+00> : vector<4x128xf32>
    %8 = tpu.matmul %6, %7, %cst_7 {dimension_numbers = #tpu.dot_dimension_numbers<[1], [0], [0], [1], [0, 0, 1, 1], [], []>} : vector<4x128xbf16>, vector<128x128xbf16>, vector<4x128xf32> -> vector<4x128xf32>
    %c0_8 = arith.constant 0 : index
    %c0_9 = arith.constant 0 : index
    %9 = vector.load %arg5[%c0_8, %c0_9] : memref<1x128xf32, #tpu.memory_space<vmem>>, vector<1x128xf32>
    %10 = vector.broadcast %9 : vector<1x128xf32> to vector<4x128xf32>
    %11 = arith.addf %8, %10 : vector<4x128xf32>
    %cst_10 = arith.constant 0.000000e+00 : f32
    %12 = vector.broadcast %cst_10 : f32 to vector<4x128xf32>
    %13 = arith.maximumf %11, %12 : vector<4x128xf32>
    %14 = arith.truncf %13 : vector<4x128xf32> to vector<4x128xbf16>
    %c0_11 = arith.constant 0 : index
    %c0_12 = arith.constant 0 : index
    %15 = vector.load %arg6[%c0_11, %c0_12] : memref<128x128xbf16, #tpu.memory_space<vmem>>, vector<128x128xbf16>
    %cst_13 = arith.constant dense<0.000000e+00> : vector<4x128xf32>
    %16 = tpu.matmul %14, %15, %cst_13 {dimension_numbers = #tpu.dot_dimension_numbers<[1], [0], [0], [1], [0, 0, 1, 1], [], []>} : vector<4x128xbf16>, vector<128x128xbf16>, vector<4x128xf32> -> vector<4x128xf32>
    %c0_14 = arith.constant 0 : index
    %c0_15 = arith.constant 0 : index
    %17 = vector.load %arg7[%c0_14, %c0_15] : memref<1x128xf32, #tpu.memory_space<vmem>>, vector<1x128xf32>
    %18 = vector.broadcast %17 : vector<1x128xf32> to vector<4x128xf32>
    %19 = arith.addf %16, %18 : vector<4x128xf32>
    %c0_16 = arith.constant 0 : index
    %c0_17 = arith.constant 0 : index
    %20 = vector.load %arg8[%c0_16, %c0_17] : memref<4x128xf32, #tpu.memory_space<vmem>>, vector<4x128xf32>
    tpu.vector_store %arg8[%c0_16, %c0_17], %19 {strides = array<i32>} : memref<4x128xf32, #tpu.memory_space<vmem>>, vector<4x128xf32>,
    return
  }
  func.func @transform_0(%arg0: i32) -> (i32, i32) {
    %c0_i32 = arith.constant 0 : i32
    %c0_i32_0 = arith.constant 0 : i32
    return %arg0, %c0_i32 : i32, i32
  }
  func.func @transform_1(%arg0: i32) -> (i32, i32) {
    %c0_i32 = arith.constant 0 : i32
    %c0_i32_0 = arith.constant 0 : i32
    %c0_i32_1 = arith.constant 0 : i32
    return %c0_i32, %c0_i32_0 : i32, i32
  }
  func.func @transform_2(%arg0: i32) -> (i32, i32) {
    %c0_i32 = arith.constant 0 : i32
    %c0_i32_0 = arith.constant 0 : i32
    %c0_i32_1 = arith.constant 0 : i32
    return %c0_i32, %c0_i32_0 : i32, i32
  }
  func.func @transform_3(%arg0: i32) -> (i32, i32) {
    %c0_i32 = arith.constant 0 : i32
    %c0_i32_0 = arith.constant 0 : i32
    %c0_i32_1 = arith.constant 0 : i32
    return %c0_i32, %c0_i32_0 : i32, i32
  }
  func.func @transform_4(%arg0: i32) -> (i32, i32) {
    %c0_i32 = arith.constant 0 : i32
    %c0_i32_0 = arith.constant 0 : i32
    %c0_i32_1 = arith.constant 0 : i32
    return %c0_i32, %c0_i32_0 : i32, i32
  }
  func.func @transform_5(%arg0: i32) -> (i32, i32) {
    %c0_i32 = arith.constant 0 : i32
    %c0_i32_0 = arith.constant 0 : i32
    %c0_i32_1 = arith.constant 0 : i32
    return %c0_i32, %c0_i32_0 : i32, i32
  }
  func.func @transform_6(%arg0: i32) -> (i32, i32) {
    %c0_i32 = arith.constant 0 : i32
    %c0_i32_0 = arith.constant 0 : i32
    %c0_i32_1 = arith.constant 0 : i32
    return %c0_i32, %c0_i32_0 : i32, i32
  }
  func.func @transform_7(%arg0: i32) -> (i32, i32) {
    %c0_i32 = arith.constant 0 : i32
    %c0_i32_0 = arith.constant 0 : i32
    return %arg0, %c0_i32 : i32, i32
  }
}

</mosaic_0001>

<llo_original>
// kernel: mlp_forward.1
$region0: #{mlp_forward.1}
  #allocation0 [shape = 'u32[]', space=smem, size = 0x4, offset = 0x4, fixed_abs, tag = 'smem constant byte address 0x4 - core index']
  #allocation1 [shape = 'u32[144,128]{1,0:T(1,128)}', space=vmem, size = 0x12000, scoped, tag = 'internal scratch']
  %s0 = inlined_call_operand.hbm [shape: bf16[4,64], index: 0, kind: input, shape index: {}]
  %s1 = inlined_call_operand.hbm [shape: bf16[64,128], index: 1, kind: input, shape index: {}]
  %s2 = inlined_call_operand.hbm [shape: f32[1,128], index: 2, kind: input, shape index: {}]
  %s3 = inlined_call_operand.hbm [shape: bf16[128,128], index: 3, kind: input, shape index: {}]
  %s4 = inlined_call_operand.hbm [shape: f32[1,128], index: 4, kind: input, shape index: {}]
  %s5 = inlined_call_operand.hbm [shape: bf16[128,128], index: 5, kind: input, shape index: {}]
  %s6 = inlined_call_operand.hbm [shape: f32[1,128], index: 6, kind: input, shape index: {}]
  %s7 = inlined_call_operand.hbm [shape: f32[4,128], index: 7, kind: output, shape index: {}]
  %s8 = sld [smem:[#allocation0]]
  $region66: #{mlp_forward.1} parent=0
    _
  %s10 = ssub.s32 1, %s8
  %s11 = scalar_select 0, %s10, %s8
  $region1: #{mlp_forward.1} parent=0
    #allocation2 [shape = 'u8[1024]{0}', space=vmem, size = 0x400, scoped, tag = 'input window, operand 0, single buffered']
    #allocation3 [shape = 's32[1]{0}', space=sflag, size = 0x4, scoped, tag = 'scoped memory for mlp_forward.1']
    #allocation4 [shape = 's32[1]{0}', space=sflag, size = 0x4, scoped, tag = 'scoped memory for mlp_forward.1']
    #allocation5 [shape = 'u8[16384]{0}', space=vmem, size = 0x4000, scoped, tag = 'input window, operand 1, single buffered']
    #allocation6 [shape = 's32[1]{0}', space=sflag, size = 0x4, scoped, tag = 'scoped memory for mlp_forward.1']
    #allocation7 [shape = 'u8[512]{0}', space=vmem, size = 0x400, scoped, tag = 'input window, operand 2, single buffered']
    #allocation8 [shape = 'u8[32768]{0}', space=vmem, size = 0x8000, scoped, tag = 'input window, operand 3, single buffered']
    #allocation9 [shape = 's32[1]{0}', space=sflag, size = 0x4, scoped, tag = 'scoped memory for mlp_forward.1']
    #allocation10 [shape = 'u8[512]{0}', space=vmem, size = 0x400, scoped, tag = 'input window, operand 4, single buffered']
    #allocation11 [shape = 'u8[32768]{0}', space=vmem, size = 0x8000, scoped, tag = 'input window, operand 5, single buffered']
    #allocation12 [shape = 's32[1]{0}', space=sflag, size = 0x4, scoped, tag = 'scoped memory for mlp_forward.1']
    #allocation13 [shape = 'u8[512]{0}', space=vmem, size = 0x400, scoped, tag = 'input window, operand 6, single buffered']
    #allocation14 [shape = 'u8[2048]{0}', space=vmem, size = 0x800, scoped, tag = 'output window, operand 0, single buffered']
    %12 = vsyncpa [#allocation3], 0
    %13 = vsyncpa [#allocation6], 0
    %14 = vsyncpa [#allocation9], 0
    %15 = vsyncpa [#allocation12], 0
    %16 = vsyncpa [#allocation4], 0
    // Predicated region
    $region2: #{mlp_forward.1} parent=1 // pred_check
      _
    $region3: #{mlp_forward.1} parent=1 // pred_check_branch
      %18 = sbr.rel (0) target = $region5
    $region4: #{mlp_forward.1} parent=1 // pred_region
      %s20 = ssub.s32 32, 32
      %21 = vsyncadd [#allocation3], %s20
      %s23 = sshll.u32 [#allocation2], 4
      %s24 = int_to_ptr.vmem [resolvable:$true] %s23
      %26 = dma.hbm_to_vmem [thread:$0]  %s0, 32, %s24, [#allocation3]
    $region5: #{mlp_forward.1} parent=1 // pred_fallthru
      _
    // Predicated region
    $region6: #{mlp_forward.1} parent=1 // pred_check
      _
    $region7: #{mlp_forward.1} parent=1 // pred_check_branch
      %28 = sbr.rel (0) target = $region9
    $region8: #{mlp_forward.1} parent=1 // pred_region
      %s30 = ssub.s32 512, 512
      %31 = vsyncadd [#allocation6], %s30
      %s32 = sshll.u32 [#allocation5], 4
      %s33 = int_to_ptr.vmem [resolvable:$true] %s32
      %38 = dma.hbm_to_vmem [thread:$0]  %s1, 512, %s33, [#allocation6], 64, 64, 4
    $region9: #{mlp_forward.1} parent=1 // pred_fallthru
      _
    // Predicated region
    $region10: #{mlp_forward.1} parent=1 // pred_check
      _
    $region11: #{mlp_forward.1} parent=1 // pred_check_branch
      %40 = sbr.rel (0) target = $region13
    $region12: #{mlp_forward.1} parent=1 // pred_region
      %s42 = ssub.s32 16, 16
      %43 = vsyncadd [#allocation6], %s42
      %s45 = sshll.u32 [#allocation7], 4
      %s46 = int_to_ptr.vmem [resolvable:$true] %s45
      %48 = dma.hbm_to_vmem [thread:$0]  %s2, 16, %s46, [#allocation6]
    $region13: #{mlp_forward.1} parent=1 // pred_fallthru
      _
    // Predicated region
    $region14: #{mlp_forward.1} parent=1 // pred_check
      _
    $region15: #{mlp_forward.1} parent=1 // pred_check_branch
      %50 = sbr.rel (0) target = $region17
    $region16: #{mlp_forward.1} parent=1 // pred_region
      %s52 = ssub.s32 1024, 1024
      %53 = vsyncadd [#allocation9], %s52
      %s54 = sshll.u32 [#allocation8], 4
      %s55 = int_to_ptr.vmem [resolvable:$true] %s54
      %60 = dma.hbm_to_vmem [thread:$0]  %s3, 1024, %s55, [#allocation9], 64, 64, 4
    $region17: #{mlp_forward.1} parent=1 // pred_fallthru
      _
    // Predicated region
    $region18: #{mlp_forward.1} parent=1 // pred_check
      _
    $region19: #{mlp_forward.1} parent=1 // pred_check_branch
      %62 = sbr.rel (0) target = $region21
    $region20: #{mlp_forward.1} parent=1 // pred_region
      %s64 = ssub.s32 16, 16
      %65 = vsyncadd [#allocation9], %s64
      %s67 = sshll.u32 [#allocation10], 4
      %s68 = int_to_ptr.vmem [resolvable:$true] %s67
      %70 = dma.hbm_to_vmem [thread:$0]  %s4, 16, %s68, [#allocation9]
    $region21: #{mlp_forward.1} parent=1 // pred_fallthru
      _
    // Predicated region
    $region22: #{mlp_forward.1} parent=1 // pred_check
      _
    $region23: #{mlp_forward.1} parent=1 // pred_check_branch
      %72 = sbr.rel (0) target = $region25
    $region24: #{mlp_forward.1} parent=1 // pred_region
      %s74 = ssub.s32 1024, 1024
      %75 = vsyncadd [#allocation12], %s74
      %s76 = sshll.u32 [#allocation11], 4
      %s77 = int_to_ptr.vmem [resolvable:$true] %s76
      %82 = dma.hbm_to_vmem [thread:$0]  %s5, 1024, %s77, [#allocation12], 64, 64, 4
    $region25: #{mlp_forward.1} parent=1 // pred_fallthru
      _
    // Predicated region
    $region26: #{mlp_forward.1} parent=1 // pred_check
      _
    $region27: #{mlp_forward.1} parent=1 // pred_check_branch
      %84 = sbr.rel (0) target = $region29
    $region28: #{mlp_forward.1} parent=1 // pred_region
      %s86 = ssub.s32 16, 16
      %87 = vsyncadd [#allocation12], %s86
      %s89 = sshll.u32 [#allocation13], 4
      %s90 = int_to_ptr.vmem [resolvable:$true] %s89
      %92 = dma.hbm_to_vmem [thread:$0]  %s6, 16, %s90, [#allocation12]
    $region29: #{mlp_forward.1} parent=1 // pred_fallthru
      _
    // Predicated region
    $region30: #{mlp_forward.1} parent=1 // pred_check
      _
    $region31: #{mlp_forward.1} parent=1 // pred_check_branch
      %94 = sbr.rel (0) target = $region33
    $region32: #{mlp_forward.1} parent=1 // pred_region
      %95 = dma.done [#allocation3], 32
    $region33: #{mlp_forward.1} parent=1 // pred_fallthru
      _
    // Predicated region
    $region34: #{mlp_forward.1} parent=1 // pred_check
      _
    $region35: #{mlp_forward.1} parent=1 // pred_check_branch
      %97 = sbr.rel (0) target = $region37
    $region36: #{mlp_forward.1} parent=1 // pred_region
      %98 = dma.done [#allocation6], 512
    $region37: #{mlp_forward.1} parent=1 // pred_fallthru
      _
    // Predicated region
    $region38: #{mlp_forward.1} parent=1 // pred_check
      _
    $region39: #{mlp_forward.1} parent=1 // pred_check_branch
      %100 = sbr.rel (0) target = $region41
    $region40: #{mlp_forward.1} parent=1 // pred_region
      %101 = dma.done [#allocation6], 16
    $region41: #{mlp_forward.1} parent=1 // pred_fallthru
      _
    // Predicated region
    $region42: #{mlp_forward.1} parent=1 // pred_check
      _
    $region43: #{mlp_forward.1} parent=1 // pred_check_branch
      %103 = sbr.rel (0) target = $region45
    $region44: #{mlp_forward.1} parent=1 // pred_region
      %104 = dma.done [#allocation9], 1024
    $region45: #{mlp_forward.1} parent=1 // pred_fallthru
      _
    // Predicated region
    $region46: #{mlp_forward.1} parent=1 // pred_check
      _
    $region47: #{mlp_forward.1} parent=1 // pred_check_branch
      %106 = sbr.rel (0) target = $region49
    $region48: #{mlp_forward.1} parent=1 // pred_region
      %107 = dma.done [#allocation9], 16
    $region49: #{mlp_forward.1} parent=1 // pred_fallthru
      _
    // Predicated region
    $region50: #{mlp_forward.1} parent=1 // pred_check
      _
    $region51: #{mlp_forward.1} parent=1 // pred_check_branch
      %109 = sbr.rel (0) target = $region53
    $region52: #{mlp_forward.1} parent=1 // pred_region
      %110 = dma.done [#allocation12], 1024
    $region53: #{mlp_forward.1} parent=1 // pred_fallthru
      _
    // Predicated region
    $region54: #{mlp_forward.1} parent=1 // pred_check
      _
    $region55: #{mlp_forward.1} parent=1 // pred_check_branch
      %112 = sbr.rel (0) target = $region57
    $region56: #{mlp_forward.1} parent=1 // pred_region
      %113 = dma.done [#allocation12], 16
    $region57: #{mlp_forward.1} parent=1 // pred_fallthru
      _
    %v115 = vld [vmem:[#allocation2] sm:$0x3]
    %v116 = vld [vmem:[#allocation5] sm:$0xf]
    %v117 = vld [vmem:[#allocation5 + $0x4] sm:$0xf]
    %v118 = vld [vmem:[#allocation5 + $0x8] sm:$0xf]
    %v119 = vld [vmem:[#allocation5 + $0xc] sm:$0xf]
    %v120 = vld [vmem:[#allocation5 + $0x10] sm:$0xf]
    %v121 = vld [vmem:[#allocation5 + $0x14] sm:$0xf]
    %v122 = vld [vmem:[#allocation5 + $0x18] sm:$0xf]
    %v123 = vld [vmem:[#allocation5 + $0x1c] sm:$0xf]
    %v124 = vld [vmem:[#allocation7] sm:$0x1]
    %v126 = vlaneseq
    %v127 = vshrl.u32 %v126, 7
    %v128 = vsub.s32 0, %v127
    %v129 = vrot.slane %v124, %v128
    %v139 = vunpack.c.l.b16 %v116
    %v140 = vunpack.c.l.b16 %v117
    %v141 = vunpack.c.l.b16 %v118
    %v142 = vunpack.c.l.b16 %v119
    %v143 = vunpack.c.l.b16 %v120
    %v144 = vunpack.c.l.b16 %v121
    %v145 = vunpack.c.l.b16 %v122
    %v146 = vunpack.c.l.b16 %v123
    %v147 = vpack.c.b16 %v140, %v139
    %v148 = vpack.c.b16 %v142, %v141
    %v149 = vpack.c.b16 %v144, %v143
    %v150 = vpack.c.b16 %v146, %v145
    %vm155 = vcmask 523264
    %v157 = vsel %vm155, %v115, 0
    %159 = vmatprep.subr.bf16.mxu0 0
    %160 = vmatpush1.bf16.msra.mxu0 %v147
    %161 = vmatprep.subr.bf16.mxu0 0
    %162 = vmatpush1.bf16.msra.mxu0 %v148
    %163 = vmatprep.subr.bf16.mxu0 0
    %164 = vmatpush1.bf16.msra.mxu0 %v149
    %165 = vmatprep.subr.bf16.mxu0 0
    %166 = vmatpush1.bf16.msra.mxu0 %v150
    %167 = vmatprep.subr.bf16.mxu0 0
    %168 = vmatpush1.bf16.msra.mxu0 0
    %169 = vmatprep.subr.bf16.mxu0 0
    %170 = vmatpush1.bf16.msra.mxu0 0
    %171 = vmatprep.subr.bf16.mxu0 0
    %172 = vmatpush1.bf16.msra.mxu0 0
    %173 = vmatprep.subr.bf16.mxu0 0
    %174 = vmatpush1.bf16.msra.mxu0 0
    %175 = vmatprep.subr.bf16.mxu0 0
    %176 = vmatpush1.bf16.msra.mxu0 0
    %177 = vmatprep.subr.bf16.mxu0 0
    %178 = vmatpush1.bf16.msra.mxu0 0
    %179 = vmatprep.subr.bf16.mxu0 0
    %180 = vmatpush1.bf16.msra.mxu0 0
    %181 = vmatprep.subr.bf16.mxu0 0
    %182 = vmatpush1.bf16.msra.mxu0 0
    %183 = vmatprep.subr.bf16.mxu0 0
    %184 = vmatpush1.bf16.msra.mxu0 0
    %185 = vmatprep.subr.bf16.mxu0 0
    %186 = vmatpush1.bf16.msra.mxu0 0
    %187 = vmatprep.subr.bf16.mxu0 0
    %188 = vmatpush1.bf16.msra.mxu0 0
    %189 = vmatprep.subr.bf16.mxu0 0
    %190 = vmatpush1.bf16.msra.mxu0 0
    %191 = vmatprep.mubr.bf16.mxu0 0
    %192 = vmatmul.mubr.bf16.gmra.mrb[0].mxu0 %v157
    %v193 = vpop.f32.mrb[0].mxu0
    %v194 = vadd.f32 %v129, %v193
    %v195 = vpop.f32.mrb[0].mxu0
    %v196 = vpop.f32.mrb[0].mxu0
    %v197 = vpop.f32.mrb[0].mxu0
    %198 = vdwg.mxu0
    %v199 = vpack.c.bf16 %v194, %v194
    %v200 = vld [vmem:[#allocation8] sm:$0xf]
    %v201 = vld [vmem:[#allocation8 + $0x4] sm:$0xf]
    %v202 = vld [vmem:[#allocation8 + $0x8] sm:$0xf]
    %v203 = vld [vmem:[#allocation8 + $0xc] sm:$0xf]
    %v204 = vld [vmem:[#allocation8 + $0x10] sm:$0xf]
    %v205 = vld [vmem:[#allocation8 + $0x14] sm:$0xf]
    %v206 = vld [vmem:[#allocation8 + $0x18] sm:$0xf]
    %v207 = vld [vmem:[#allocation8 + $0x1c] sm:$0xf]
    %v208 = vld [vmem:[#allocation8 + $0x20] sm:$0xf]
    %v209 = vld [vmem:[#allocation8 + $0x24] sm:$0xf]
    %v210 = vld [vmem:[#allocation8 + $0x28] sm:$0xf]
    %v211 = vld [vmem:[#allocation8 + $0x2c] sm:$0xf]
    %v212 = vld [vmem:[#allocation8 + $0x30] sm:$0xf]
    %v213 = vld [vmem:[#allocation8 + $0x34] sm:$0xf]
    %v214 = vld [vmem:[#allocation8 + $0x38] sm:$0xf]
    %v215 = vld [vmem:[#allocation8 + $0x3c] sm:$0xf]
    %v216 = vld [vmem:[#allocation10] sm:$0x1]
    %v218 = vlaneseq
    %v219 = vshrl.u32 %v218, 7
    %v220 = vsub.s32 0, %v219
    %v221 = vrot.slane %v216, %v220
    %v239 = vunpack.c.l.b16 %v200
    %v240 = vunpack.c.l.b16 %v201
    %v241 = vunpack.c.l.b16 %v202
    %v242 = vunpack.c.l.b16 %v203
    %v243 = vunpack.c.l.b16 %v204
    %v244 = vunpack.c.l.b16 %v205
    %v245 = vunpack.c.l.b16 %v206
    %v246 = vunpack.c.l.b16 %v207
    %v247 = vunpack.c.l.b16 %v208
    %v248 = vunpack.c.l.b16 %v209
    %v249 = vunpack.c.l.b16 %v210
    %v250 = vunpack.c.l.b16 %v211
    %v251 = vunpack.c.l.b16 %v212
    %v252 = vunpack.c.l.b16 %v213
    %v253 = vunpack.c.l.b16 %v214
    %v254 = vunpack.c.l.b16 %v215
    %v255 = vpack.c.b16 %v240, %v239
    %v256 = vpack.c.b16 %v242, %v241
    %v257 = vpack.c.b16 %v244, %v243
    %v258 = vpack.c.b16 %v246, %v245
    %v259 = vpack.c.b16 %v248, %v247
    %v260 = vpack.c.b16 %v250, %v249
    %v261 = vpack.c.b16 %v252, %v251
    %v262 = vpack.c.b16 %v254, %v253
    %271 = vmatprep.subr.bf16.mxu0 0
    %272 = vmatpush1.bf16.msra.mxu0 %v255
    %273 = vmatprep.subr.bf16.mxu0 0
    %274 = vmatpush1.bf16.msra.mxu0 %v256
    %275 = vmatprep.subr.bf16.mxu0 0
    %276 = vmatpush1.bf16.msra.mxu0 %v257
    %277 = vmatprep.subr.bf16.mxu0 0
    %278 = vmatpush1.bf16.msra.mxu0 %v258
    %279 = vmatprep.subr.bf16.mxu0 0
    %280 = vmatpush1.bf16.msra.mxu0 %v259
    %281 = vmatprep.subr.bf16.mxu0 0
    %282 = vmatpush1.bf16.msra.mxu0 %v260
    %283 = vmatprep.subr.bf16.mxu0 0
    %284 = vmatpush1.bf16.msra.mxu0 %v261
    %285 = vmatprep.subr.bf16.mxu0 0
    %286 = vmatpush1.bf16.msra.mxu0 %v262
    %287 = vmatprep.subr.bf16.mxu0 0
    %288 = vmatpush1.bf16.msra.mxu0 0
    %289 = vmatprep.subr.bf16.mxu0 0
    %290 = vmatpush1.bf16.msra.mxu0 0
    %291 = vmatprep.subr.bf16.mxu0 0
    %292 = vmatpush1.bf16.msra.mxu0 0
    %293 = vmatprep.subr.bf16.mxu0 0
    %294 = vmatpush1.bf16.msra.mxu0 0
    %295 = vmatprep.subr.bf16.mxu0 0
    %296 = vmatpush1.bf16.msra.mxu0 0
    %297 = vmatprep.subr.bf16.mxu0 0
    %298 = vmatpush1.bf16.msra.mxu0 0
    %299 = vmatprep.subr.bf16.mxu0 0
    %300 = vmatpush1.bf16.msra.mxu0 0
    %301 = vmatprep.subr.bf16.mxu0 0
    %302 = vmatpush1.bf16.msra.mxu0 0
    %303 = vmatprep.mubr.bf16.mxu0 0
    %304 = vmatmul.mubr.bf16.gmra.mrb[0].mxu0 %v199
    %v305 = vpop.f32.mrb[0].mxu0
    %v306 = vadd.f32 %v221, %v305
    %v307 = vpop.f32.mrb[0].mxu0
    %v308 = vpop.f32.mrb[0].mxu0
    %v309 = vpop.f32.mrb[0].mxu0
    %310 = vdwg.mxu0
    %v311 = vmax.f32 %v306, 0.0
    %v312 = vpack.c.bf16 %v311, %v311
    %v313 = vld [vmem:[#allocation11] sm:$0xf]
    %v314 = vld [vmem:[#allocation11 + $0x4] sm:$0xf]
    %v315 = vld [vmem:[#allocation11 + $0x8] sm:$0xf]
    %v316 = vld [vmem:[#allocation11 + $0xc] sm:$0xf]
    %v317 = vld [vmem:[#allocation11 + $0x10] sm:$0xf]
    %v318 = vld [vmem:[#allocation11 + $0x14] sm:$0xf]
    %v319 = vld [vmem:[#allocation11 + $0x18] sm:$0xf]
    %v320 = vld [vmem:[#allocation11 + $0x1c] sm:$0xf]
    %v321 = vld [vmem:[#allocation11 + $0x20] sm:$0xf]
    %v322 = vld [vmem:[#allocation11 + $0x24] sm:$0xf]
    %v323 = vld [vmem:[#allocation11 + $0x28] sm:$0xf]
    %v324 = vld [vmem:[#allocation11 + $0x2c] sm:$0xf]
    %v325 = vld [vmem:[#allocation11 + $0x30] sm:$0xf]
    %v326 = vld [vmem:[#allocation11 + $0x34] sm:$0xf]
    %v327 = vld [vmem:[#allocation11 + $0x38] sm:$0xf]
    %v328 = vld [vmem:[#allocation11 + $0x3c] sm:$0xf]
    %v329 = vld [vmem:[#allocation13] sm:$0x1]
    %v331 = vlaneseq
    %v332 = vshrl.u32 %v331, 7
    %v333 = vsub.s32 0, %v332
    %v334 = vrot.slane %v329, %v333
    %v352 = vunpack.c.l.b16 %v313
    %v353 = vunpack.c.l.b16 %v314
    %v354 = vunpack.c.l.b16 %v315
    %v355 = vunpack.c.l.b16 %v316
    %v356 = vunpack.c.l.b16 %v317
    %v357 = vunpack.c.l.b16 %v318
    %v358 = vunpack.c.l.b16 %v319
    %v359 = vunpack.c.l.b16 %v320
    %v360 = vunpack.c.l.b16 %v321
    %v361 = vunpack.c.l.b16 %v322
    %v362 = vunpack.c.l.b16 %v323
    %v363 = vunpack.c.l.b16 %v324
    %v364 = vunpack.c.l.b16 %v325
    %v365 = vunpack.c.l.b16 %v326
    %v366 = vunpack.c.l.b16 %v327
    %v367 = vunpack.c.l.b16 %v328
    %v368 = vpack.c.b16 %v353, %v352
    %v369 = vpack.c.b16 %v355, %v354
    %v370 = vpack.c.b16 %v357, %v356
    %v371 = vpack.c.b16 %v359, %v358
    %v372 = vpack.c.b16 %v361, %v360
    %v373 = vpack.c.b16 %v363, %v362
    %v374 = vpack.c.b16 %v365, %v364
    %v375 = vpack.c.b16 %v367, %v366
    %384 = vmatprep.subr.bf16.mxu0 0
    %385 = vmatpush1.bf16.msra.mxu0 %v368
    %386 = vmatprep.subr.bf16.mxu0 0
    %387 = vmatpush1.bf16.msra.mxu0 %v369
    %388 = vmatprep.subr.bf16.mxu0 0
    %389 = vmatpush1.bf16.msra.mxu0 %v370
    %390 = vmatprep.subr.bf16.mxu0 0
    %391 = vmatpush1.bf16.msra.mxu0 %v371
    %392 = vmatprep.subr.bf16.mxu0 0
    %393 = vmatpush1.bf16.msra.mxu0 %v372
    %394 = vmatprep.subr.bf16.mxu0 0
    %395 = vmatpush1.bf16.msra.mxu0 %v373
    %396 = vmatprep.subr.bf16.mxu0 0
    %397 = vmatpush1.bf16.msra.mxu0 %v374
    %398 = vmatprep.subr.bf16.mxu0 0
    %399 = vmatpush1.bf16.msra.mxu0 %v375
    %400 = vmatprep.subr.bf16.mxu0 0
    %401 = vmatpush1.bf16.msra.mxu0 0
    %402 = vmatprep.subr.bf16.mxu0 0
    %403 = vmatpush1.bf16.msra.mxu0 0
    %404 = vmatprep.subr.bf16.mxu0 0
    %405 = vmatpush1.bf16.msra.mxu0 0
    %406 = vmatprep.subr.bf16.mxu0 0
    %407 = vmatpush1.bf16.msra.mxu0 0
    %408 = vmatprep.subr.bf16.mxu0 0
    %409 = vmatpush1.bf16.msra.mxu0 0
    %410 = vmatprep.subr.bf16.mxu0 0
    %411 = vmatpush1.bf16.msra.mxu0 0
    %412 = vmatprep.subr.bf16.mxu0 0
    %413 = vmatpush1.bf16.msra.mxu0 0
    %414 = vmatprep.subr.bf16.mxu0 0
    %415 = vmatpush1.bf16.msra.mxu0 0
    %416 = vmatprep.mubr.bf16.mxu0 0
    %417 = vmatmul.mubr.bf16.gmra.mrb[0].mxu0 %v312
    %v418 = vpop.f32.mrb[0].mxu0
    %v419 = vadd.f32 %v334, %v418
    %v420 = vpop.f32.mrb[0].mxu0
    %v421 = vpop.f32.mrb[0].mxu0
    %v422 = vpop.f32.mrb[0].mxu0
    %423 = vdwg.mxu0
    %424 = vst [vmem:[#allocation14] sm:$0xf] %v419
    // Predicated region
    $region58: #{mlp_forward.1} parent=1 // pred_check
      _
    $region59: #{mlp_forward.1} parent=1 // pred_check_branch
      %426 = sbr.rel (0) target = $region61
    $region60: #{mlp_forward.1} parent=1 // pred_region
      %s428 = ssub.s32 64, 64
      %429 = vsyncadd [#allocation4], %s428
      %s431 = sshll.u32 [#allocation14], 4
      %s432 = int_to_ptr.vmem [resolvable:$true] %s431
      %434 = dma.vmem_to_hbm [thread:$0]  %s432, 64, %s7, [#allocation4]
    $region61: #{mlp_forward.1} parent=1 // pred_fallthru
      _
    // Predicated region
    $region62: #{mlp_forward.1} parent=1 // pred_check
      _
    $region63: #{mlp_forward.1} parent=1 // pred_check_branch
      %436 = sbr.rel (0) target = $region65
    $region64: #{mlp_forward.1} parent=1 // pred_region
      %437 = dma.done [#allocation4], 64
    $region65: #{mlp_forward.1} parent=1 // pred_fallthru
      _
    %438 = vsyncpa [#allocation3], 1
    %439 = vsyncpa [#allocation6], 1
    %440 = vsyncpa [#allocation9], 1
    %441 = vsyncpa [#allocation12], 1
    %442 = vsyncpa [#allocation4], 1

</llo_original>
